<compile_context>
chip_gen: v6e
topology: v6e:2x2x1
jax: 0.10.0
libtpu: 0.0.40
codegen_flags: <defaults>
</compile_context>

<pallas_src>
import functools

import numpy as np
import jax
import jax.numpy as jnp
from jax.experimental import pallas as pl
from jax.experimental.pallas import tpu as pltpu


# ----------------------------------------------------------------------------
# Fused Pallas kernel: conv3x3 + PReLU + CAM, one batch element per grid step
# ----------------------------------------------------------------------------

def _conv_prelu_cam_kernel(x_ref, w_ref, b_ref, w1t_ref, b1_ref, w2_ref,
                           b2_ref, mask_ref, alpha_ref, o_ref, *,
                           Wp, L_out, inv_hw):
    """One batch element: conv3x3 (single K=9*Ci matmul) -> PReLU -> CAM."""
    x = x_ref[0]                                             # (Ci, L_in) bf16

    # Stack the nine shifted bf16 slices along sublanes -> (9*Ci, L_out).
    # Tap t = ky*3+kx starts at ky*Wp+kx; the row-block order matches the
    # (Co, 9*Ci) weight layout built in the wrapper.
    taps = []
    for t in range(9):
        ky, kx = divmod(t, 3)
        start = ky * Wp + kx
        taps.append(x[:, start:start + L_out])               # (Ci, L_out) bf16
    xk = jnp.concatenate(taps, axis=0)                       # (9*Ci, L_out)

    # Single MXU matmul (bf16 operands, f32 accumulation); bias added once.
    acc = jnp.dot(w_ref[...], xk,
                  preferred_element_type=jnp.float32)        # (Co, L_out) f32
    acc = acc + b_ref[...]                                   # (Co, 1) bias

    # Fused PReLU (f32 elementwise on the VPU; v5e-safe).
    a_conv = alpha_ref[0]
    y = jnp.where(acc >= 0.0, acc, a_conv * acc)             # (Co, L_out)

    # CAM: masked global avg pool -> tiny MLP on VPU/XLU -> sigmoid -> x*(1+s)
    valid = mask_ref[...]                                    # (1, L_out)
    pooled = jnp.sum(y * valid, axis=1, keepdims=True) * inv_hw       # (Co, 1)
    h = jnp.sum(w1t_ref[...] * pooled, axis=0, keepdims=True) \
        + b1_ref[...]                                        # (1, hidden)
    a_cam = alpha_ref[1]
    h = jnp.where(h >= 0.0, h, a_cam * h)                    # PReLU in CAM MLP
    s = jax.nn.sigmoid(
        jnp.sum(w2_ref[...] * h, axis=1, keepdims=True) + b2_ref[...])  # (Co,1)

    o_ref[0] = (y * (1.0 + s)).astype(o_ref.dtype)           # x*s + x


# ----------------------------------------------------------------------------
# Wrapper: layout prep (bf16 pad/flatten), BlockSpecs, cost estimate
# ----------------------------------------------------------------------------

def conv_prelu_cam(params, x, *, mxu_dtype=jnp.bfloat16):
    """ConvPReluCAM forward, NCHW float32 in/out."""
    B, Ci, H, W = x.shape
    w = params['conv_w']
    Co = w.shape[0]
    hidden = params['w1'].shape[0]
    Hp, Wp = H + 2, W + 2
    HWp = H * Wp                                   # flattened wide-row length

    # Lane-dense output slab length (multiple of 128).
    L_out = -(-HWp // 128) * 128
    # Input slab must cover the last tap's window (start up to 2*Wp+2); fold
    # the extra flat-axis padding into zero rows at the bottom so a single
    # bf16 pad suffices.
    required = L_out + 2 * Wp + 2
    extra_rows = max(0, -(-(required - Hp * Wp) // Wp))
    L_in = (Hp + extra_rows) * Wp

    x_flat = jnp.pad(x.astype(mxu_dtype),
                     ((0, 0), (0, 0), (1, 1 + extra_rows), (1, 1))
                     ).reshape(B, Ci, L_in)

    # (Co, Ci, 3, 3) -> (Co, 9*Ci), column index t*Ci + ci with t = ky*3+kx,
    # matching the sublane order of the stacked slices inside the kernel.
    w_flat = jnp.transpose(w, (0, 2, 3, 1)).reshape(Co, 9 * Ci).astype(mxu_dtype)
    b_col = params['conv_b'].reshape(Co, 1).astype(jnp.float32)
    w1t = jnp.transpose(params['w1']).astype(jnp.float32)       # (Co, hidden)
    b1_row = params['b1'].reshape(1, hidden).astype(jnp.float32)
    w2 = params['w2'].astype(jnp.float32)                       # (Co, hidden)
    b2_col = params['b2'].reshape(Co, 1).astype(jnp.float32)
    alphas = jnp.stack(
        [jnp.asarray(params['prelu_alpha'], jnp.float32).reshape(()),
         jnp.asarray(params['cam_alpha'], jnp.float32).reshape(())])

    # 1.0 on real pixels (row < H, col < W); 0.0 on wide-row junk and tail pad.
    idx = np.arange(L_out)
    valid_mask = jnp.asarray(((idx < HWp) & (idx % Wp < W)).astype(np.float32)
                             ).reshape(1, L_out)

    kernel = functools.partial(_conv_prelu_cam_kernel,
                               Wp=Wp, L_out=L_out, inv_hw=1.0 / (H * W))

    itemsize = np.dtype(mxu_dtype).itemsize
    flops = 2 * B * Co * 9 * Ci * L_out + 4 * B * hidden * Co
    bytes_accessed = (B * Ci * L_in * itemsize + 9 * Co * Ci * itemsize
                      + B * Co * L_out * 4 + (2 * Co + 2 * hidden * Co) * 4)

    out_wide = pl.pallas_call(
        kernel,
        out_shape=jax.ShapeDtypeStruct((B, Co, L_out), jnp.float32),
        grid=(B,),
        in_specs=[
            pl.BlockSpec((1, Ci, L_in), lambda b: (b, 0, 0)),     # padded input
            pl.BlockSpec((Co, 9 * Ci), lambda b: (0, 0)),         # conv weights
            pl.BlockSpec((Co, 1), lambda b: (0, 0)),              # conv bias
            pl.BlockSpec((Co, hidden), lambda b: (0, 0)),         # CAM fc1 w^T
            pl.BlockSpec((1, hidden), lambda b: (0, 0)),          # CAM fc1 b
            pl.BlockSpec((Co, hidden), lambda b: (0, 0)),         # CAM fc2 w
            pl.BlockSpec((Co, 1), lambda b: (0, 0)),              # CAM fc2 b
            pl.BlockSpec((1, L_out), lambda b: (0, 0)),           # validity mask
            pl.BlockSpec(memory_space=pltpu.MemorySpace.SMEM),    # PReLU alphas
        ],
        out_specs=pl.BlockSpec((1, Co, L_out), lambda b: (b, 0, 0)),
        compiler_params=pltpu.CompilerParams(
            dimension_semantics=("parallel",)),
        cost_estimate=pl.CostEstimate(
            flops=int(flops), transcendentals=int(B * (Co + hidden)),
            bytes_accessed=int(bytes_accessed)),
    )(x_flat, w_flat, b_col, w1t, b1_row, w2, b2_col, valid_mask, alphas)

    # Drop the tail padding and the 2 junk columns of each wide row.
    return out_wide[:, :, :HWp].reshape(B, Co, H, Wp)[:, :, :, :W]


# ----------------------------------------------------------------------------
# Pure-JAX reference (mirrors the PyTorch module) for a correctness check
# ----------------------------------------------------------------------------

def _reference(p, x):
    y = jax.lax.conv_general_dilated(
        x, p['conv_w'], window_strides=(1, 1), padding=((1, 1), (1, 1)),
        dimension_numbers=('NCHW', 'OIHW', 'NCHW'))
    y = y + p['conv_b'][None, :, None, None]
    y = jnp.where(y >= 0.0, y, p['prelu_alpha'] * y)                 # PReLU
    pooled = jnp.mean(y, axis=(2, 3))                                # (B, C)
    h = pooled @ p['w1'].T + p['b1']
    h = jnp.where(h >= 0.0, h, p['cam_alpha'] * h)                   # PReLU
    s = jax.nn.sigmoid(h @ p['w2'].T + p['b2'])                      # (B, C)
    return y * (1.0 + s[:, :, None, None])                           # x*s + x


# ----------------------------------------------------------------------------

if __name__ == "__main__":
    key = jax.random.PRNGKey(0)
    B, C, H, W = 2, 32, 16, 16          # num_feat=32, squeeze_factor=16
    hidden = C // 16
    ks = jax.random.split(key, 7)

    params = {
        'conv_w': jax.random.normal(ks[0], (C, C, 3, 3), jnp.float32) * 0.05,
        'conv_b': jax.random.normal(ks[1], (C,), jnp.float32) * 0.01,
        'prelu_alpha': jnp.asarray(0.25, jnp.float32),   # nn.PReLU default
        'w1': jax.random.normal(ks[2], (hidden, C), jnp.float32) * 0.1,
        'b1': jax.random.normal(ks[3], (hidden,), jnp.float32) * 0.01,
        'cam_alpha': jnp.asarray(0.25, jnp.float32),
        'w2': jax.random.normal(ks[4], (C, hidden), jnp.float32) * 0.1,
        'b2': jax.random.normal(ks[5], (C,), jnp.float32) * 0.01,
    }
    x = jax.random.normal(ks[6], (B, C, H, W), jnp.float32)

    fwd = jax.jit(conv_prelu_cam)
    out = fwd(params, x)
    jax.block_until_ready(out)

    assert out.shape == (B, C, H, W)
    assert bool(jnp.all(jnp.isfinite(out)))

    # Correctness vs. pure-JAX reference (loose tol: bf16 MXU operands).
    ref = _reference(params, x)
    np.testing.assert_allclose(np.asarray(out), np.asarray(ref),
                               rtol=5e-2, atol=5e-2)
    print("KERNEL_OK")
</pallas_src>

<mosaic_0001>
module attributes {stable_mosaic.version = 11 : i64} {
  func.func @_conv_prelu_cam_kernel(%arg0: i32, %arg1: memref<1x32x432xbf16, #tpu.memory_space<vmem>>, %arg2: memref<32x288xbf16, #tpu.memory_space<vmem>>, %arg3: memref<32x1xf32, #tpu.memory_space<vmem>>, %arg4: memref<32x2xf32, #tpu.memory_space<vmem>>, %arg5: memref<1x2xf32, #tpu.memory_space<vmem>>, %arg6: memref<32x2xf32, #tpu.memory_space<vmem>>, %arg7: memref<32x1xf32, #tpu.memory_space<vmem>>, %arg8: memref<1x384xf32, #tpu.memory_space<vmem>>, %arg9: memref<2xf32, #tpu.memory_space<smem>>, %arg10: memref<1x32x384xf32, #tpu.memory_space<vmem>>) attributes {dimension_semantics = [#tpu.dimension_semantics<parallel>], iteration_bounds = array<i64: 2>, scalar_prefetch = 0 : i64, scratch_operands = 0 : i64, tpu.core_type = #tpu.core_type<tc>, window_params = [{transform_indices = @transform_0, window_bounds = array<i64: 1, 32, 432>}, {pipeline_mode = #tpu.pipeline_mode<synchronous>, transform_indices = @transform_1, window_bounds = array<i64: 32, 288>}, {pipeline_mode = #tpu.pipeline_mode<synchronous>, transform_indices = @transform_2, window_bounds = array<i64: 32, 1>}, {pipeline_mode = #tpu.pipeline_mode<synchronous>, transform_indices = @transform_3, window_bounds = array<i64: 32, 2>}, {pipeline_mode = #tpu.pipeline_mode<synchronous>, transform_indices = @transform_4, window_bounds = array<i64: 1, 2>}, {pipeline_mode = #tpu.pipeline_mode<synchronous>, transform_indices = @transform_5, window_bounds = array<i64: 32, 2>}, {pipeline_mode = #tpu.pipeline_mode<synchronous>, transform_indices = @transform_6, window_bounds = array<i64: 32, 1>}, {pipeline_mode = #tpu.pipeline_mode<synchronous>, transform_indices = @transform_7, window_bounds = array<i64: 1, 384>}, {transform_indices = @transform_8, window_bounds = array<i64: 2>}, {transform_indices = @transform_9, window_bounds = array<i64: 1, 32, 384>}]} {
    %c0 = arith.constant 0 : index
    %c0_0 = arith.constant 0 : index
    %c0_1 = arith.constant 0 : index
    %0 = vector.load %arg1[%c0, %c0_0, %c0_1] : memref<1x32x432xbf16, #tpu.memory_space<vmem>>, vector<1x32x432xbf16>
    %1 = vector.shape_cast %0 : vector<1x32x432xbf16> to vector<32x432xbf16>
    %2 = vector.extract_strided_slice %1 {offsets = [0, 0], sizes = [32, 384], strides = [1, 1]} : vector<32x432xbf16> to vector<32x384xbf16>
    %3 = vector.extract_strided_slice %1 {offsets = [0, 1], sizes = [32, 384], strides = [1, 1]} : vector<32x432xbf16> to vector<32x384xbf16>
    %4 = vector.extract_strided_slice %1 {offsets = [0, 2], sizes = [32, 384], strides = [1, 1]} : vector<32x432xbf16> to vector<32x384xbf16>
    %5 = vector.extract_strided_slice %1 {offsets = [0, 18], sizes = [32, 384], strides = [1, 1]} : vector<32x432xbf16> to vector<32x384xbf16>
    %6 = vector.extract_strided_slice %1 {offsets = [0, 19], sizes = [32, 384], strides = [1, 1]} : vector<32x432xbf16> to vector<32x384xbf16>
    %7 = vector.extract_strided_slice %1 {offsets = [0, 20], sizes = [32, 384], strides = [1, 1]} : vector<32x432xbf16> to vector<32x384xbf16>
    %8 = vector.extract_strided_slice %1 {offsets = [0, 36], sizes = [32, 384], strides = [1, 1]} : vector<32x432xbf16> to vector<32x384xbf16>
    %9 = vector.extract_strided_slice %1 {offsets = [0, 37], sizes = [32, 384], strides = [1, 1]} : vector<32x432xbf16> to vector<32x384xbf16>
    %10 = vector.extract_strided_slice %1 {offsets = [0, 38], sizes = [32, 384], strides = [1, 1]} : vector<32x432xbf16> to vector<32x384xbf16>
    %11 = tpu.concatenate %2, %3, %4, %5, %6, %7, %8, %9, %10 in 0 : vector<32x384xbf16>, vector<32x384xbf16>, vector<32x384xbf16>, vector<32x384xbf16>, vector<32x384xbf16>, vector<32x384xbf16>, vector<32x384xbf16>, vector<32x384xbf16>, vector<32x384xbf16> -> vector<288x384xbf16>
    %c0_2 = arith.constant 0 : index
    %c0_3 = arith.constant 0 : index
    %12 = vector.load %arg2[%c0_2, %c0_3] : memref<32x288xbf16, #tpu.memory_space<vmem>>, vector<32x288xbf16>
    %cst = arith.constant dense<0.000000e+00> : vector<32x384xf32>
    %13 = tpu.matmul %12, %11, %cst {dimension_numbers = #tpu.dot_dimension_numbers<[1], [0], [0], [1], [0, 0, 1, 1], [], []>} : vector<32x288xbf16>, vector<288x384xbf16>, vector<32x384xf32> -> vector<32x384xf32>
    %c0_4 = arith.constant 0 : index
    %c0_5 = arith.constant 0 : index
    %14 = vector.load %arg3[%c0_4, %c0_5] : memref<32x1xf32, #tpu.memory_space<vmem>>, vector<32x1xf32>
    %15 = vector.broadcast %14 : vector<32x1xf32> to vector<32x384xf32>
    %16 = arith.addf %13, %15 : vector<32x384xf32>
    %c0_6 = arith.constant 0 : index
    %17 = memref.load %arg9[%c0_6] : memref<2xf32, #tpu.memory_space<smem>>
    %cst_7 = arith.constant 0.000000e+00 : f32
    %18 = vector.broadcast %cst_7 : f32 to vector<32x384xf32>
    %19 = arith.cmpf oge, %16, %18 : vector<32x384xf32>
    %20 = vector.broadcast %17 : f32 to vector<32x384xf32>
    %21 = arith.mulf %20, %16 : vector<32x384xf32>
    %22 = arith.select %19, %16, %21 : vector<32x384xi1>, vector<32x384xf32>
    %c0_8 = arith.constant 0 : index
    %c0_9 = arith.constant 0 : index
    %23 = vector.load %arg8[%c0_8, %c0_9] : memref<1x384xf32, #tpu.memory_space<vmem>>, vector<1x384xf32>
    %24 = vector.broadcast %23 : vector<1x384xf32> to vector<32x384xf32>
    %25 = arith.mulf %22, %24 : vector<32x384xf32>
    %cst_10 = arith.constant dense<0.000000e+00> : vector<32xf32>
    %26 = vector.multi_reduction <add>, %25, %cst_10 [1] : vector<32x384xf32> to vector<32xf32>
    %27 = vector.shape_cast %26 : vector<32xf32> to vector<32x1xf32>
    %cst_11 = arith.constant 3.906250e-03 : f32
    %28 = vector.broadcast %cst_11 : f32 to vector<32x1xf32>
    %29 = arith.mulf %27, %28 : vector<32x1xf32>
    %c0_12 = arith.constant 0 : index
    %c0_13 = arith.constant 0 : index
    %30 = vector.load %arg4[%c0_12, %c0_13] : memref<32x2xf32, #tpu.memory_space<vmem>>, vector<32x2xf32>
    %31 = vector.broadcast %29 : vector<32x1xf32> to vector<32x2xf32>
    %32 = arith.mulf %30, %31 : vector<32x2xf32>
    %cst_14 = arith.constant dense<0.000000e+00> : vector<2xf32>
    %33 = vector.multi_reduction <add>, %32, %cst_14 [0] : vector<32x2xf32> to vector<2xf32>
    %34 = vector.shape_cast %33 : vector<2xf32> to vector<1x2xf32>
    %c0_15 = arith.constant 0 : index
    %c0_16 = arith.constant 0 : index
    %35 = vector.load %arg5[%c0_15, %c0_16] : memref<1x2xf32, #tpu.memory_space<vmem>>, vector<1x2xf32>
    %36 = arith.addf %34, %35 : vector<1x2xf32>
    %c1 = arith.constant 1 : index
    %37 = memref.load %arg9[%c1] : memref<2xf32, #tpu.memory_space<smem>>
    %cst_17 = arith.constant 0.000000e+00 : f32
    %38 = vector.broadcast %cst_17 : f32 to vector<1x2xf32>
    %39 = arith.cmpf oge, %36, %38 : vector<1x2xf32>
    %40 = vector.broadcast %37 : f32 to vector<1x2xf32>
    %41 = arith.mulf %40, %36 : vector<1x2xf32>
    %42 = arith.select %39, %36, %41 : vector<1x2xi1>, vector<1x2xf32>
    %c0_18 = arith.constant 0 : index
    %c0_19 = arith.constant 0 : index
    %43 = vector.load %arg6[%c0_18, %c0_19] : memref<32x2xf32, #tpu.memory_space<vmem>>, vector<32x2xf32>
    %44 = vector.broadcast %42 : vector<1x2xf32> to vector<32x2xf32>
    %45 = arith.mulf %43, %44 : vector<32x2xf32>
    %cst_20 = arith.constant dense<0.000000e+00> : vector<32xf32>
    %46 = vector.multi_reduction <add>, %45, %cst_20 [1] : vector<32x2xf32> to vector<32xf32>
    %47 = vector.shape_cast %46 : vector<32xf32> to vector<32x1xf32>
    %c0_21 = arith.constant 0 : index
    %c0_22 = arith.constant 0 : index
    %48 = vector.load %arg7[%c0_21, %c0_22] : memref<32x1xf32, #tpu.memory_space<vmem>>, vector<32x1xf32>
    %49 = arith.addf %47, %48 : vector<32x1xf32>
    %50 = arith.negf %49 : vector<32x1xf32>
    %51 = math.exp %50 : vector<32x1xf32>
    %cst_23 = arith.constant 1.000000e+00 : f32
    %52 = vector.broadcast %cst_23 : f32 to vector<32x1xf32>
    %53 = arith.addf %52, %51 : vector<32x1xf32>
    %54 = arith.divf %52, %53 : vector<32x1xf32>
    %cst_24 = arith.constant 1.000000e+00 : f32
    %55 = vector.broadcast %cst_24 : f32 to vector<32x1xf32>
    %56 = arith.addf %55, %54 : vector<32x1xf32>
    %57 = vector.broadcast %56 : vector<32x1xf32> to vector<32x384xf32>
    %58 = arith.mulf %22, %57 : vector<32x384xf32>
    %c0_25 = arith.constant 0 : index
    %c0_26 = arith.constant 0 : index
    %c0_27 = arith.constant 0 : index
    %59 = vector.load %arg10[%c0_25, %c0_26, %c0_27] : memref<1x32x384xf32, #tpu.memory_space<vmem>>, vector<1x32x384xf32>
    %60 = vector.shape_cast %59 : vector<1x32x384xf32> to vector<32x384xf32>
    %61 = vector.shape_cast %58 : vector<32x384xf32> to vector<1x32x384xf32>
    tpu.vector_store %arg10[%c0_25, %c0_26, %c0_27], %61 {strides = array<i32>} : memref<1x32x384xf32, #tpu.memory_space<vmem>>, vector<1x32x384xf32>,
    return
  }
  func.func @transform_0(%arg0: i32) -> (i32, i32, i32) {
    %c0_i32 = arith.constant 0 : i32
    %c0_i32_0 = arith.constant 0 : i32
    %c0_i32_1 = arith.constant 0 : i32
    return %arg0, %c0_i32, %c0_i32_0 : i32, i32, i32
  }
  func.func @transform_1(%arg0: i32) -> (i32, i32) {
    %c0_i32 = arith.constant 0 : i32
    %c0_i32_0 = arith.constant 0 : i32
    %c0_i32_1 = arith.constant 0 : i32
    return %c0_i32, %c0_i32_0 : i32, i32
  }
  func.func @transform_2(%arg0: i32) -> (i32, i32) {
    %c0_i32 = arith.constant 0 : i32
    %c0_i32_0 = arith.constant 0 : i32
    %c0_i32_1 = arith.constant 0 : i32
    return %c0_i32, %c0_i32_0 : i32, i32
  }
  func.func @transform_3(%arg0: i32) -> (i32, i32) {
    %c0_i32 = arith.constant 0 : i32
    %c0_i32_0 = arith.constant 0 : i32
    %c0_i32_1 = arith.constant 0 : i32
    return %c0_i32, %c0_i32_0 : i32, i32
  }
  func.func @transform_4(%arg0: i32) -> (i32, i32) {
    %c0_i32 = arith.constant 0 : i32
    %c0_i32_0 = arith.constant 0 : i32
    %c0_i32_1 = arith.constant 0 : i32
    return %c0_i32, %c0_i32_0 : i32, i32
  }
  func.func @transform_5(%arg0: i32) -> (i32, i32) {
    %c0_i32 = arith.constant 0 : i32
    %c0_i32_0 = arith.constant 0 : i32
    %c0_i32_1 = arith.constant 0 : i32
    return %c0_i32, %c0_i32_0 : i32, i32
  }
  func.func @transform_6(%arg0: i32) -> (i32, i32) {
    %c0_i32 = arith.constant 0 : i32
    %c0_i32_0 = arith.constant 0 : i32
    %c0_i32_1 = arith.constant 0 : i32
    return %c0_i32, %c0_i32_0 : i32, i32
  }
  func.func @transform_7(%arg0: i32) -> (i32, i32) {
    %c0_i32 = arith.constant 0 : i32
    %c0_i32_0 = arith.constant 0 : i32
    %c0_i32_1 = arith.constant 0 : i32
    return %c0_i32, %c0_i32_0 : i32, i32
  }
  func.func @transform_8(%arg0: i32) -> i32 {
    %c0_i32 = arith.constant 0 : i32
    %c0_i32_0 = arith.constant 0 : i32
    return %c0_i32 : i32
  }
  func.func @transform_9(%arg0: i32) -> (i32, i32, i32) {
    %c0_i32 = arith.constant 0 : i32
    %c0_i32_0 = arith.constant 0 : i32
    %c0_i32_1 = arith.constant 0 : i32
    return %arg0, %c0_i32, %c0_i32_0 : i32, i32, i32
  }
}

</mosaic_0001>

<llo_original>
// kernel: conv_prelu_cam.1
$region0: #{conv_prelu_cam.1}
  #allocation0 [shape = 'u32[]', space=smem, size = 0x4, offset = 0x4, fixed_abs, tag = 'smem constant byte address 0x4 - core index']
  #allocation1 [shape = 'u32[144,128]{1,0:T(1,128)}', space=vmem, size = 0x12000, scoped, tag = 'internal scratch']
  %s0 = inlined_call_operand.vmem [shape: bf16[2,32,432], index: 0, kind: input, shape index: {}]
  %s1 = inlined_call_operand.vmem [shape: bf16[32,288], index: 1, kind: input, shape index: {}]
  %s2 = inlined_call_operand.vmem [shape: f32[32,1], index: 2, kind: input, shape index: {}]
  %s3 = inlined_call_operand.vmem [shape: f32[32,2], index: 3, kind: input, shape index: {}]
  %s4 = inlined_call_operand.vmem [shape: f32[1,2], index: 4, kind: input, shape index: {}]
  %s5 = inlined_call_operand.vmem [shape: f32[32,2], index: 5, kind: input, shape index: {}]
  %s6 = inlined_call_operand.vmem [shape: f32[32,1], index: 6, kind: input, shape index: {}]
  %s7 = inlined_call_operand.vmem [shape: f32[1,384], index: 7, kind: input, shape index: {}]
  %s8 = inlined_call_operand.vmem [shape: f32[2], index: 8, kind: input, shape index: {}]
  %s9 = inlined_call_operand.vmem [shape: f32[2,32,384], index: 9, kind: output, shape index: {}]
  %s10 = sld [smem:[#allocation0]]
  $region73: #{conv_prelu_cam.1} parent=0
    _
  %s12 = ssub.s32 1, %s10
  %s13 = scalar_select 0, %s12, %s10
  $region1: #{conv_prelu_cam.1} parent=0
    #allocation2 [shape = 'u8[512]{0}', space=smem, size = 0x200, scoped, tag = 'input window, operand 8, single buffered']
    #allocation3 [shape = 's32[2]{0}', space=sflag, size = 0x8, scoped, tag = 'scoped memory for conv_prelu_cam.1']
    %14 = vsyncpa [#allocation3], 0
    loop: start=0, step=1, limit=4
    $region2: #{conv_prelu_cam.1} parent=1 // loop_pre_header
      _
    $region3: #{conv_prelu_cam.1} parent=1 // loop_header
      %s16 = sphi 0, %s20
      %p17 = scmp.ge.s32.totalorder %s16, 4
      %s26 = sphi 0, %s28
      %s29 = sphi 0, %s26
      %s30 = sphi 0, %s29
      %s46 = sphi 0, %s30
      %s50 = sphi 0, %s50
      %s52 = sphi 0, %s50
      %s53 = sphi 0, %s52
      %s67 = sphi 0, %s53
      %s71 = sphi 0, %s71
      %s73 = sphi 0, %s71
      %s74 = sphi 0, %s73
      %s88 = sphi 0, %s74
      %s92 = sphi 0, %s92
      %s94 = sphi 0, %s92
      %s95 = sphi 0, %s94
      %s109 = sphi 0, %s95
      %s113 = sphi 0, %s113
      %s115 = sphi 0, %s113
      %s116 = sphi 0, %s115
      %s130 = sphi 0, %s116
      %s134 = sphi 0, %s134
      %s136 = sphi 0, %s134
      %s137 = sphi 0, %s136
      %s151 = sphi 0, %s137
      %s155 = sphi 0, %s155
      %s157 = sphi 0, %s155
      %s158 = sphi 0, %s157
      %s172 = sphi 0, %s158
      %s176 = sphi 0, %s176
      %s178 = sphi 0, %s176
      %s179 = sphi 0, %s178
      %s193 = sphi 0, %s179
      %s197 = sphi 0, %s197
      %s199 = sphi 0, %s197
      %s200 = sphi 0, %s199
      %s214 = sphi 0, %s200
      %s220 = sphi 0, %s222
      %s223 = sphi 0, %s220
      %s224 = sphi 0, %s223
      %s240 = sphi 0, %s224
    $region4: #{conv_prelu_cam.1} parent=1 // loop_header_branch
      %19 = sbr.rel (%p17) target = $region8
    $region5: #{conv_prelu_cam.1} parent=1 // loop_body
      %s21 = ssub.s32 %s16, 1
      %s22 = ssub.s32 %s16, 2
      %s23 = sadd.s32 %s16, 1
      %s24 = ssub.s32 %s16, %s23
      %p25 = scmp.eq.s32.totalorder %s24, 0
      %s27 = sadd.s32 %s26, 1
      %s28 = scalar_select %p25, %s26, %s27
      %p31 = pneg %p25
      %p32 = scmp.eq.s32.totalorder %s16, 1
      %p33 = por %p31, %p32
      %p34 = scmp.ne.s32.totalorder %s26, %s29
      %p35 = scmp.eq.s32.totalorder %s16, 0
      %p36 = por %p34, %p35
      %p37 = scmp.ne.s32.totalorder %s26, %s29
      %p38 = scmp.eq.s32.totalorder %s21, 1
      %p39 = por %p37, %p38
      %p40 = scmp.ne.s32.totalorder %s29, %s30
      %p41 = scmp.eq.s32.totalorder %s21, 0
      %p42 = por %p40, %p41
      %p43 = scmp.ne.s32.totalorder %s29, %s30
      %p44 = scmp.eq.s32.totalorder %s22, 1
      %p45 = por %p43, %p44
      %p47 = scmp.ne.s32.totalorder %s30, %s46
      %p48 = scmp.eq.s32.totalorder %s22, 0
      %p49 = por %p47, %p48
      %s51 = sadd.s32 %s50, 1
      %p54 = scmp.eq.s32.totalorder %s16, 1
      %p55 = scmp.ne.s32.totalorder %s50, %s52
      %p56 = scmp.eq.s32.totalorder %s16, 0
      %p57 = por %p55, %p56
      %p58 = scmp.ne.s32.totalorder %s50, %s52
      %p59 = scmp.eq.s32.totalorder %s21, 1
      %p60 = por %p58, %p59
      %p61 = scmp.ne.s32.totalorder %s52, %s53
      %p62 = scmp.eq.s32.totalorder %s21, 0
      %p63 = por %p61, %p62
      %p64 = scmp.ne.s32.totalorder %s52, %s53
      %p65 = scmp.eq.s32.totalorder %s22, 1
      %p66 = por %p64, %p65
      %p68 = scmp.ne.s32.totalorder %s53, %s67
      %p69 = scmp.eq.s32.totalorder %s22, 0
      %p70 = por %p68, %p69
      %s72 = sadd.s32 %s71, 1
      %p75 = scmp.eq.s32.totalorder %s16, 1
      %p76 = scmp.ne.s32.totalorder %s71, %s73
      %p77 = scmp.eq.s32.totalorder %s16, 0
      %p78 = por %p76, %p77
      %p79 = scmp.ne.s32.totalorder %s71, %s73
      %p80 = scmp.eq.s32.totalorder %s21, 1
      %p81 = por %p79, %p80
      %p82 = scmp.ne.s32.totalorder %s73, %s74
      %p83 = scmp.eq.s32.totalorder %s21, 0
      %p84 = por %p82, %p83
      %p85 = scmp.ne.s32.totalorder %s73, %s74
      %p86 = scmp.eq.s32.totalorder %s22, 1
      %p87 = por %p85, %p86
      %p89 = scmp.ne.s32.totalorder %s74, %s88
      %p90 = scmp.eq.s32.totalorder %s22, 0
      %p91 = por %p89, %p90
      %s93 = sadd.s32 %s92, 1
      %p96 = scmp.eq.s32.totalorder %s16, 1
      %p97 = scmp.ne.s32.totalorder %s92, %s94
      %p98 = scmp.eq.s32.totalorder %s16, 0
      %p99 = por %p97, %p98
      %p100 = scmp.ne.s32.totalorder %s92, %s94
      %p101 = scmp.eq.s32.totalorder %s21, 1
      %p102 = por %p100, %p101
      %p103 = scmp.ne.s32.totalorder %s94, %s95
      %p104 = scmp.eq.s32.totalorder %s21, 0
      %p105 = por %p103, %p104
      %p106 = scmp.ne.s32.totalorder %s94, %s95
      %p107 = scmp.eq.s32.totalorder %s22, 1
      %p108 = por %p106, %p107
      %p110 = scmp.ne.s32.totalorder %s95, %s109
      %p111 = scmp.eq.s32.totalorder %s22, 0
      %p112 = por %p110, %p111
      %s114 = sadd.s32 %s113, 1
      %p117 = scmp.eq.s32.totalorder %s16, 1
      %p118 = scmp.ne.s32.totalorder %s113, %s115
      %p119 = scmp.eq.s32.totalorder %s16, 0
      %p120 = por %p118, %p119
      %p121 = scmp.ne.s32.totalorder %s113, %s115
      %p122 = scmp.eq.s32.totalorder %s21, 1
      %p123 = por %p121, %p122
      %p124 = scmp.ne.s32.totalorder %s115, %s116
      %p125 = scmp.eq.s32.totalorder %s21, 0
      %p126 = por %p124, %p125
      %p127 = scmp.ne.s32.totalorder %s115, %s116
      %p128 = scmp.eq.s32.totalorder %s22, 1
      %p129 = por %p127, %p128
      %p131 = scmp.ne.s32.totalorder %s116, %s130
      %p132 = scmp.eq.s32.totalorder %s22, 0
      %p133 = por %p131, %p132
      %s135 = sadd.s32 %s134, 1
      %p138 = scmp.eq.s32.totalorder %s16, 1
      %p139 = scmp.ne.s32.totalorder %s134, %s136
      %p140 = scmp.eq.s32.totalorder %s16, 0
      %p141 = por %p139, %p140
      %p142 = scmp.ne.s32.totalorder %s134, %s136
      %p143 = scmp.eq.s32.totalorder %s21, 1
      %p144 = por %p142, %p143
      %p145 = scmp.ne.s32.totalorder %s136, %s137
      %p146 = scmp.eq.s32.totalorder %s21, 0
      %p147 = por %p145, %p146
      %p148 = scmp.ne.s32.totalorder %s136, %s137
      %p149 = scmp.eq.s32.totalorder %s22, 1
      %p150 = por %p148, %p149
      %p152 = scmp.ne.s32.totalorder %s137, %s151
      %p153 = scmp.eq.s32.totalorder %s22, 0
      %p154 = por %p152, %p153
      %s156 = sadd.s32 %s155, 1
      %p159 = scmp.eq.s32.totalorder %s16, 1
      %p160 = scmp.ne.s32.totalorder %s155, %s157
      %p161 = scmp.eq.s32.totalorder %s16, 0
      %p162 = por %p160, %p161
      %p163 = scmp.ne.s32.totalorder %s155, %s157
      %p164 = scmp.eq.s32.totalorder %s21, 1
      %p165 = por %p163, %p164
      %p166 = scmp.ne.s32.totalorder %s157, %s158
      %p167 = scmp.eq.s32.totalorder %s21, 0
      %p168 = por %p166, %p167
      %p169 = scmp.ne.s32.totalorder %s157, %s158
      %p170 = scmp.eq.s32.totalorder %s22, 1
      %p171 = por %p169, %p170
      %p173 = scmp.ne.s32.totalorder %s158, %s172
      %p174 = scmp.eq.s32.totalorder %s22, 0
      %p175 = por %p173, %p174
      %s177 = sadd.s32 %s176, 1
      %p180 = scmp.eq.s32.totalorder %s16, 1
      %p181 = scmp.ne.s32.totalorder %s176, %s178
      %p182 = scmp.eq.s32.totalorder %s16, 0
      %p183 = por %p181, %p182
      %p184 = scmp.ne.s32.totalorder %s176, %s178
      %p185 = scmp.eq.s32.totalorder %s21, 1
      %p186 = por %p184, %p185
      %p187 = scmp.ne.s32.totalorder %s178, %s179
      %p188 = scmp.eq.s32.totalorder %s21, 0
      %p189 = por %p187, %p188
      %p190 = scmp.ne.s32.totalorder %s178, %s179
      %p191 = scmp.eq.s32.totalorder %s22, 1
      %p192 = por %p190, %p191
      %p194 = scmp.ne.s32.totalorder %s179, %s193
      %p195 = scmp.eq.s32.totalorder %s22, 0
      %p196 = por %p194, %p195
      %s198 = sadd.s32 %s197, 1
      %p201 = scmp.eq.s32.totalorder %s16, 1
      %p202 = scmp.ne.s32.totalorder %s197, %s199
      %p203 = scmp.eq.s32.totalorder %s16, 0
      %p204 = por %p202, %p203
      %p205 = scmp.ne.s32.totalorder %s197, %s199
      %p206 = scmp.eq.s32.totalorder %s21, 1
      %p207 = por %p205, %p206
      %p208 = scmp.ne.s32.totalorder %s199, %s200
      %p209 = scmp.eq.s32.totalorder %s21, 0
      %p210 = por %p208, %p209
      %p211 = scmp.ne.s32.totalorder %s199, %s200
      %p212 = scmp.eq.s32.totalorder %s22, 1
      %p213 = por %p211, %p212
      %p215 = scmp.ne.s32.totalorder %s200, %s214
      %p216 = scmp.eq.s32.totalorder %s22, 0
      %p217 = por %p215, %p216
      %s218 = ssub.s32 %s16, %s23
      %p219 = scmp.eq.s32.totalorder %s218, 0
      %s221 = sadd.s32 %s220, 1
      %s222 = scalar_select %p219, %s220, %s221
      %p225 = pneg %p219
      %p226 = scmp.eq.s32.totalorder %s16, 1
      %p227 = por %p225, %p226
      %p228 = scmp.ne.s32.totalorder %s220, %s223
      %p229 = scmp.eq.s32.totalorder %s16, 0
      %p230 = por %p228, %p229
      %p231 = scmp.ne.s32.totalorder %s220, %s223
      %p232 = scmp.eq.s32.totalorder %s21, 1
      %p233 = por %p231, %p232
      %p234 = scmp.ne.s32.totalorder %s223, %s224
      %p235 = scmp.eq.s32.totalorder %s21, 0
      %p236 = por %p234, %p235
      %p237 = scmp.ne.s32.totalorder %s223, %s224
      %p238 = scmp.eq.s32.totalorder %s22, 1
      %p239 = por %p237, %p238
      %p241 = scmp.ne.s32.totalorder %s224, %s240
      %p242 = scmp.eq.s32.totalorder %s22, 0
      %p243 = por %p241, %p242
      %p244 = scmp.le.s32.totalorder 1, %s16
      %p245 = scmp.lt.s32.totalorder %s16, 3
      %p246 = pnand %p244, %p245
      %p247 = pneg %p246
      // Predicated region
      $region9: #{conv_prelu_cam.1} parent=5 // pred_check
        _
      $region10: #{conv_prelu_cam.1} parent=5 // pred_check_branch
        %249 = sbr.rel (%p246) target = $region12
      $region11: #{conv_prelu_cam.1} parent=5 // pred_region
        %s250 = ssub.s32 %s16, 1
        // Predicated region
        $region13: #{conv_prelu_cam.1} parent=11 // pred_check
          %p251 = pneg %p63
        $region14: #{conv_prelu_cam.1} parent=11 // pred_check_branch
          %253 = sbr.rel (%p251) target = $region16
        $region15: #{conv_prelu_cam.1} parent=11 // pred_region
          _
        $region16: #{conv_prelu_cam.1} parent=11 // pred_fallthru
          _
        // Predicated region
        $region17: #{conv_prelu_cam.1} parent=11 // pred_check
          %p254 = pneg %p84
        $region18: #{conv_prelu_cam.1} parent=11 // pred_check_branch
          %256 = sbr.rel (%p254) target = $region20
        $region19: #{conv_prelu_cam.1} parent=11 // pred_region
          _
        $region20: #{conv_prelu_cam.1} parent=11 // pred_fallthru
          _
        // Predicated region
        $region21: #{conv_prelu_cam.1} parent=11 // pred_check
          %p257 = pneg %p105
        $region22: #{conv_prelu_cam.1} parent=11 // pred_check_branch
          %259 = sbr.rel (%p257) target = $region24
        $region23: #{conv_prelu_cam.1} parent=11 // pred_region
          _
        $region24: #{conv_prelu_cam.1} parent=11 // pred_fallthru
          _
        // Predicated region
        $region25: #{conv_prelu_cam.1} parent=11 // pred_check
          %p260 = pneg %p126
        $region26: #{conv_prelu_cam.1} parent=11 // pred_check_branch
          %262 = sbr.rel (%p260) target = $region28
        $region27: #{conv_prelu_cam.1} parent=11 // pred_region
          _
        $region28: #{conv_prelu_cam.1} parent=11 // pred_fallthru
          _
        // Predicated region
        $region29: #{conv_prelu_cam.1} parent=11 // pred_check
          %p263 = pneg %p147
        $region30: #{conv_prelu_cam.1} parent=11 // pred_check_branch
          %265 = sbr.rel (%p263) target = $region32
        $region31: #{conv_prelu_cam.1} parent=11 // pred_region
          _
        $region32: #{conv_prelu_cam.1} parent=11 // pred_fallthru
          _
        // Predicated region
        $region33: #{conv_prelu_cam.1} parent=11 // pred_check
          %p266 = pneg %p168
        $region34: #{conv_prelu_cam.1} parent=11 // pred_check_branch
          %268 = sbr.rel (%p266) target = $region36
        $region35: #{conv_prelu_cam.1} parent=11 // pred_region
          _
        $region36: #{conv_prelu_cam.1} parent=11 // pred_fallthru
          _
        // Predicated region
        $region37: #{conv_prelu_cam.1} parent=11 // pred_check
          %p269 = pneg %p189
        $region38: #{conv_prelu_cam.1} parent=11 // pred_check_branch
          %271 = sbr.rel (%p269) target = $region40
        $region39: #{conv_prelu_cam.1} parent=11 // pred_region
          _
        $region40: #{conv_prelu_cam.1} parent=11 // pred_fallthru
          _
        // Predicated region
        $region41: #{conv_prelu_cam.1} parent=11 // pred_check
          %p272 = pneg %p210
        $region42: #{conv_prelu_cam.1} parent=11 // pred_check_branch
          %274 = sbr.rel (%p272) target = $region44
        $region43: #{conv_prelu_cam.1} parent=11 // pred_region
          %s276 = ssub.s32 16, 16
          %277 = vsyncadd [#allocation3], %s276
          %s279 = sshll.u32 %s8, 4
          %s280 = int_to_ptr.vmem [resolvable:$true] %s279
          %282 = dma.vmem_to_smem %s280, 16, [#allocation2], [#allocation3]
        $region44: #{conv_prelu_cam.1} parent=11 // pred_fallthru
          _
      $region12: #{conv_prelu_cam.1} parent=5 // pred_fallthru
        _
      %p283 = scmp.lt.s32.totalorder %s16, 2
      // Predicated region
      $region45: #{conv_prelu_cam.1} parent=5 // pred_check
        %p284 = pneg %p283
      $region46: #{conv_prelu_cam.1} parent=5 // pred_check_branch
        %286 = sbr.rel (%p284) target = $region48
      $region47: #{conv_prelu_cam.1} parent=5 // pred_region
        // Predicated region
        $region49: #{conv_prelu_cam.1} parent=47 // pred_check
          %p287 = pneg %p36
        $region50: #{conv_prelu_cam.1} parent=47 // pred_check_branch
          %289 = sbr.rel (%p287) target = $region52
        $region51: #{conv_prelu_cam.1} parent=47 // pred_region
          %p290 = scmp.lt.s32.totalorder %s16, 1
          %s291 = scalar_select %p290, %s16, 1
          %s292 = smul.addr %s291, 16
          %s293 = smul.addr %s292, 4
          %s294 = scalar_lea.vmem %s0, %s293
        $region52: #{conv_prelu_cam.1} parent=47 // pred_fallthru
          _
      $region48: #{conv_prelu_cam.1} parent=5 // pred_fallthru
        _
      %p295 = scmp.le.s32.totalorder 1, %s16
      %p296 = scmp.lt.s32.totalorder %s16, 3
      %p297 = pnand %p295, %p296
      %p298 = pneg %p297
      // Predicated region
      $region53: #{conv_prelu_cam.1} parent=5 // pred_check
        _
      $region54: #{conv_prelu_cam.1} parent=5 // pred_check_branch
        %300 = sbr.rel (%p297) target = $region56
      $region55: #{conv_prelu_cam.1} parent=5 // pred_region
        %s301 = ssub.s32 %s16, 1
        // Predicated region
        $region57: #{conv_prelu_cam.1} parent=55 // pred_check
          %p302 = pneg %p210
        $region58: #{conv_prelu_cam.1} parent=55 // pred_check_branch
          %304 = sbr.rel (%p302) target = $region60
        $region59: #{conv_prelu_cam.1} parent=55 // pred_region
          %305 = dma.done [#allocation3], 16
        $region60: #{conv_prelu_cam.1} parent=55 // pred_fallthru
          _
        %306 = sfence
        %p307 = scmp.lt.s32.totalorder %s21, 1
        %s308 = scalar_select %p307, %s21, 1
        %s309 = smul.addr %s308, 16
        %s310 = smul.addr %s309, 4
        %s311 = scalar_lea.vmem %s0, %s310
        %p312 = pneg %p42
        %p313 = pneg %p39
        %p314 = pneg %p63
        %p315 = pneg %p60
        %p316 = pneg %p84
        %p317 = pneg %p81
        %p318 = pneg %p105
        %p319 = pneg %p102
        %p320 = pneg %p126
        %p321 = pneg %p123
        %p322 = pneg %p147
        %p323 = pneg %p144
        %p324 = pneg %p168
        %p325 = pneg %p165
        %p326 = pneg %p189
        %p327 = pneg %p186
        %p328 = pneg %p210
        %p329 = pneg %p207
        %p330 = pneg %p236
        %p331 = pneg %p233
        %p332 = scmp.lt.s32.totalorder %s21, 1
        %s333 = scalar_select %p332, %s21, 1
        %s334 = smul.addr %s333, 12
        %s335 = smul.addr %s334, 8
        %s336 = scalar_lea.vmem %s9, %s335
        %p337 = scmp.lt.s32.totalorder %s21, 1
        %s338 = scalar_select %p337, %s21, 1
        %s339 = smul.addr %s338, 16
        %s340 = smul.addr %s339, 4
        %s341 = scalar_lea.vmem %s0, %s340
        %p342 = scmp.lt.s32.totalorder %s21, 1
        %s343 = scalar_select %p342, %s21, 1
        %s344 = smul.addr %s343, 12
        %s345 = smul.addr %s344, 8
        %s346 = scalar_lea.vmem %s9, %s345
        %v348 = vld [vmem:[%s341] sm:$0xff]
        %v349 = vld [vmem:[%s341 + $0x8] sm:$0xff]
        %v350 = vld [vmem:[%s341 + $0x10] sm:$0xff]
        %v351 = vld [vmem:[%s341 + $0x18] sm:$0xff]
        %v352 = vld [vmem:[%s341 + $0x20] sm:$0xff]
        %v353 = vld [vmem:[%s341 + $0x28] sm:$0xff]
        %v354 = vld [vmem:[%s341 + $0x30] sm:$0xff]
        %v355 = vld [vmem:[%s341 + $0x38] sm:$0xff]
        %v364 = vunpack.c.l.b16 %v348
        %v365 = vunpack.c.h.b16 %v348
        %v366 = vunpack.c.l.b16 %v349
        %v367 = vunpack.c.l.b16 %v350
        %v368 = vunpack.c.h.b16 %v350
        %v369 = vunpack.c.l.b16 %v351
        %v370 = vunpack.c.l.b16 %v352
        %v371 = vunpack.c.h.b16 %v352
        %v372 = vunpack.c.l.b16 %v353
        %v373 = vunpack.c.l.b16 %v354
        %v374 = vunpack.c.h.b16 %v354
        %v375 = vunpack.c.l.b16 %v355
        %v376 = vpack.c.b16 %v367, %v364
        %v377 = vpack.c.b16 %v368, %v365
        %v378 = vpack.c.b16 %v369, %v366
        %v379 = vpack.c.b16 %v373, %v370
        %v380 = vpack.c.b16 %v374, %v371
        %v381 = vpack.c.b16 %v375, %v372
        %v388 = vunpack.c.h.b16 %v349
        %v389 = vunpack.c.h.b16 %v351
        %v390 = vunpack.c.h.b16 %v353
        %v391 = vunpack.c.h.b16 %v355
        %v392 = vpack.c.b16 %v389, %v388
        %v393 = vpack.c.b16 %v391, %v390
        %394 = vrot.lane.b32.xlu0 %v376, 127
        %v395 = vpop.permute.xlu0 %394
        %396 = vrot.lane.b32.xlu0 %v377, 127
        %v397 = vpop.permute.xlu0 %396
        %398 = vrot.lane.b32.xlu0 %v378, 127
        %v399 = vpop.permute.xlu0 %398
        %400 = vrot.lane.b32.xlu0 %v392, 127
        %v401 = vpop.permute.xlu0 %400
        %402 = vrot.lane.b32.xlu0 %v379, 127
        %v403 = vpop.permute.xlu0 %402
        %404 = vrot.lane.b32.xlu0 %v380, 127
        %v405 = vpop.permute.xlu0 %404
        %406 = vrot.lane.b32.xlu0 %v381, 127
        %v407 = vpop.permute.xlu0 %406
        %408 = vrot.lane.b32.xlu0 %v393, 127
        %v409 = vpop.permute.xlu0 %408
        %vm410 = vcmask 1039360
        %v411 = vsel %vm410, %v395, %v397
        %v412 = vsel %vm410, %v397, %v399
        %v413 = vsel %vm410, %v399, %v401
        %v414 = vsel %vm410, %v403, %v405
        %v415 = vsel %vm410, %v405, %v407
        %v416 = vsel %vm410, %v407, %v409
        %423 = vrot.lane.b32.xlu0 %v376, 126
        %v424 = vpop.permute.xlu0 %423
        %425 = vrot.lane.b32.xlu0 %v377, 126
        %v426 = vpop.permute.xlu0 %425
        %427 = vrot.lane.b32.xlu0 %v378, 126
        %v428 = vpop.permute.xlu0 %427
        %429 = vrot.lane.b32.xlu0 %v392, 126
        %v430 = vpop.permute.xlu0 %429
        %431 = vrot.lane.b32.xlu0 %v379, 126
        %v432 = vpop.permute.xlu0 %431
        %433 = vrot.lane.b32.xlu0 %v380, 126
        %v434 = vpop.permute.xlu0 %433
        %435 = vrot.lane.b32.xlu0 %v381, 126
        %v436 = vpop.permute.xlu0 %435
        %437 = vrot.lane.b32.xlu0 %v393, 126
        %v438 = vpop.permute.xlu0 %437
        %vm439 = vcmask 1031168
        %v440 = vsel %vm439, %v424, %v426
        %v441 = vsel %vm439, %v426, %v428
        %v442 = vsel %vm439, %v428, %v430
        %v443 = vsel %vm439, %v432, %v434
        %v444 = vsel %vm439, %v434, %v436
        %v445 = vsel %vm439, %v436, %v438
        %452 = vrot.lane.b32.xlu0 %v376, 110
        %v453 = vpop.permute.xlu0 %452
        %454 = vrot.lane.b32.xlu0 %v377, 110
        %v455 = vpop.permute.xlu0 %454
        %456 = vrot.lane.b32.xlu0 %v378, 110
        %v457 = vpop.permute.xlu0 %456
        %458 = vrot.lane.b32.xlu0 %v392, 110
        %v459 = vpop.permute.xlu0 %458
        %460 = vrot.lane.b32.xlu0 %v379, 110
        %v461 = vpop.permute.xlu0 %460
        %462 = vrot.lane.b32.xlu0 %v380, 110
        %v463 = vpop.permute.xlu0 %462
        %464 = vrot.lane.b32.xlu0 %v381, 110
        %v465 = vpop.permute.xlu0 %464
        %466 = vrot.lane.b32.xlu0 %v393, 110
        %v467 = vpop.permute.xlu0 %466
        %vm468 = vcmask 900096
        %v469 = vsel %vm468, %v453, %v455
        %v470 = vsel %vm468, %v455, %v457
        %v471 = vsel %vm468, %v457, %v459
        %v472 = vsel %vm468, %v461, %v463
        %v473 = vsel %vm468, %v463, %v465
        %v474 = vsel %vm468, %v465, %v467
        %481 = vrot.lane.b32.xlu0 %v376, 109
        %v482 = vpop.permute.xlu0 %481
        %483 = vrot.lane.b32.xlu0 %v377, 109
        %v484 = vpop.permute.xlu0 %483
        %485 = vrot.lane.b32.xlu0 %v378, 109
        %v486 = vpop.permute.xlu0 %485
        %487 = vrot.lane.b32.xlu0 %v392, 109
        %v488 = vpop.permute.xlu0 %487
        %489 = vrot.lane.b32.xlu0 %v379, 109
        %v490 = vpop.permute.xlu0 %489
        %491 = vrot.lane.b32.xlu0 %v380, 109
        %v492 = vpop.permute.xlu0 %491
        %493 = vrot.lane.b32.xlu0 %v381, 109
        %v494 = vpop.permute.xlu0 %493
        %495 = vrot.lane.b32.xlu0 %v393, 109
        %v496 = vpop.permute.xlu0 %495
        %vm497 = vcmask 891904
        %v498 = vsel %vm497, %v482, %v484
        %v499 = vsel %vm497, %v484, %v486
        %v500 = vsel %vm497, %v486, %v488
        %v501 = vsel %vm497, %v490, %v492
        %v502 = vsel %vm497, %v492, %v494
        %v503 = vsel %vm497, %v494, %v496
        %510 = vrot.lane.b32.xlu0 %v376, 108
        %v511 = vpop.permute.xlu0 %510
        %512 = vrot.lane.b32.xlu0 %v377, 108
        %v513 = vpop.permute.xlu0 %512
        %514 = vrot.lane.b32.xlu0 %v378, 108
        %v515 = vpop.permute.xlu0 %514
        %516 = vrot.lane.b32.xlu0 %v392, 108
        %v517 = vpop.permute.xlu0 %516
        %518 = vrot.lane.b32.xlu0 %v379, 108
        %v519 = vpop.permute.xlu0 %518
        %520 = vrot.lane.b32.xlu0 %v380, 108
        %v521 = vpop.permute.xlu0 %520
        %522 = vrot.lane.b32.xlu0 %v381, 108
        %v523 = vpop.permute.xlu0 %522
        %524 = vrot.lane.b32.xlu0 %v393, 108
        %v525 = vpop.permute.xlu0 %524
        %vm526 = vcmask 883712
        %v527 = vsel %vm526, %v511, %v513
        %v528 = vsel %vm526, %v513, %v515
        %v529 = vsel %vm526, %v515, %v517
        %v530 = vsel %vm526, %v519, %v521
        %v531 = vsel %vm526, %v521, %v523
        %v532 = vsel %vm526, %v523, %v525
        %539 = vrot.lane.b32.xlu0 %v376, 92
        %v540 = vpop.permute.xlu0 %539
        %541 = vrot.lane.b32.xlu0 %v377, 92
        %v542 = vpop.permute.xlu0 %541
        %543 = vrot.lane.b32.xlu0 %v378, 92
        %v544 = vpop.permute.xlu0 %543
        %545 = vrot.lane.b32.xlu0 %v392, 92
        %v546 = vpop.permute.xlu0 %545
        %547 = vrot.lane.b32.xlu0 %v379, 92
        %v548 = vpop.permute.xlu0 %547
        %549 = vrot.lane.b32.xlu0 %v380, 92
        %v550 = vpop.permute.xlu0 %549
        %551 = vrot.lane.b32.xlu0 %v381, 92
        %v552 = vpop.permute.xlu0 %551
        %553 = vrot.lane.b32.xlu0 %v393, 92
        %v554 = vpop.permute.xlu0 %553
        %vm555 = vcmask 752640
        %v556 = vsel %vm555, %v540, %v542
        %v557 = vsel %vm555, %v542, %v544
        %v558 = vsel %vm555, %v544, %v546
        %v559 = vsel %vm555, %v548, %v550
        %v560 = vsel %vm555, %v550, %v552
        %v561 = vsel %vm555, %v552, %v554
        %568 = vrot.lane.b32.xlu0 %v376, 91
        %v569 = vpop.permute.xlu0 %568
        %570 = vrot.lane.b32.xlu0 %v377, 91
        %v571 = vpop.permute.xlu0 %570
        %572 = vrot.lane.b32.xlu0 %v378, 91
        %v573 = vpop.permute.xlu0 %572
        %574 = vrot.lane.b32.xlu0 %v392, 91
        %v575 = vpop.permute.xlu0 %574
        %576 = vrot.lane.b32.xlu0 %v379, 91
        %v577 = vpop.permute.xlu0 %576
        %578 = vrot.lane.b32.xlu0 %v380, 91
        %v579 = vpop.permute.xlu0 %578
        %580 = vrot.lane.b32.xlu0 %v381, 91
        %v581 = vpop.permute.xlu0 %580
        %582 = vrot.lane.b32.xlu0 %v393, 91
        %v583 = vpop.permute.xlu0 %582
        %vm584 = vcmask 744448
        %v585 = vsel %vm584, %v569, %v571
        %v586 = vsel %vm584, %v571, %v573
        %v587 = vsel %vm584, %v573, %v575
        %v588 = vsel %vm584, %v577, %v579
        %v589 = vsel %vm584, %v579, %v581
        %v590 = vsel %vm584, %v581, %v583
        %597 = vrot.lane.b32.xlu0 %v376, 90
        %v598 = vpop.permute.xlu0 %597
        %599 = vrot.lane.b32.xlu0 %v377, 90
        %v600 = vpop.permute.xlu0 %599
        %601 = vrot.lane.b32.xlu0 %v378, 90
        %v602 = vpop.permute.xlu0 %601
        %603 = vrot.lane.b32.xlu0 %v392, 90
        %v604 = vpop.permute.xlu0 %603
        %605 = vrot.lane.b32.xlu0 %v379, 90
        %v606 = vpop.permute.xlu0 %605
        %607 = vrot.lane.b32.xlu0 %v380, 90
        %v608 = vpop.permute.xlu0 %607
        %609 = vrot.lane.b32.xlu0 %v381, 90
        %v610 = vpop.permute.xlu0 %609
        %611 = vrot.lane.b32.xlu0 %v393, 90
        %v612 = vpop.permute.xlu0 %611
        %vm613 = vcmask 736256
        %v614 = vsel %vm613, %v598, %v600
        %v615 = vsel %vm613, %v600, %v602
        %v616 = vsel %vm613, %v602, %v604
        %v617 = vsel %vm613, %v606, %v608
        %v618 = vsel %vm613, %v608, %v610
        %v619 = vsel %vm613, %v610, %v612
        %v626 = vld [vmem:[%s1] sm:$0xff]
        %v627 = vld [vmem:[%s1 + $0x8] sm:$0xf]
        %v628 = vld [vmem:[%s1 + $0xc] sm:$0xff]
        %v629 = vld [vmem:[%s1 + $0x14] sm:$0xf]
        %v630 = vld [vmem:[%s1 + $0x18] sm:$0xff]
        %v631 = vld [vmem:[%s1 + $0x20] sm:$0xf]
        %v632 = vld [vmem:[%s1 + $0x24] sm:$0xff]
        %v633 = vld [vmem:[%s1 + $0x2c] sm:$0xf]
        %v634 = vld [vmem:[%s2] sm:$0xff]
        %v635 = vld [vmem:[%s2 + $0x8] sm:$0xff]
        %v636 = vld [vmem:[%s2 + $0x10] sm:$0xff]
        %v637 = vld [vmem:[%s2 + $0x18] sm:$0xff]
        %639 = vset.pattern.permute.xlu0 0
        %640 = vperm.xlu0 %639, %v634
        %v641 = vpop.permute.xlu0 %640
        %644 = vset.pattern.permute.xlu0 0
        %645 = vperm.xlu0 %644, %v635
        %v646 = vpop.permute.xlu0 %645
        %649 = vset.pattern.permute.xlu0 0
        %650 = vperm.xlu0 %649, %v636
        %v651 = vpop.permute.xlu0 %650
        %654 = vset.pattern.permute.xlu0 0
        %655 = vperm.xlu0 %654, %v637
        %v656 = vpop.permute.xlu0 %655
        %v666 = vunpack.c.l.b16 %v626
        %v667 = vunpack.c.h.b16 %v626
        %v668 = vunpack.c.l.b16 %v627
        %v669 = vunpack.c.l.b16 %v628
        %v670 = vunpack.c.h.b16 %v628
        %v671 = vunpack.c.l.b16 %v629
        %v672 = vunpack.c.l.b16 %v630
        %v673 = vunpack.c.h.b16 %v630
        %v674 = vunpack.c.l.b16 %v631
        %v675 = vunpack.c.l.b16 %v632
        %v676 = vunpack.c.h.b16 %v632
        %v677 = vunpack.c.l.b16 %v633
        %v678 = vpack.c.b16 %v669, %v666
        %v679 = vpack.c.b16 %v670, %v667
        %v680 = vpack.c.b16 %v671, %v668
        %v681 = vpack.c.b16 %v675, %v672
        %v682 = vpack.c.b16 %v676, %v673
        %v683 = vpack.c.b16 %v677, %v674
        %vm688 = vcmask 261120
        %v690 = vsel %vm688, %v680, 0
        %v693 = vsel %vm688, %v683, 0
        %695 = vmatprep.subr.bf16.mxu0 %v473
        %696 = vmatpush1.bf16.msra.mxu0 %v472
        %697 = vmatprep.subr.bf16.mxu0 %v470
        %698 = vmatpush1.bf16.msra.mxu0 %v469
        %699 = vmatprep.subr.bf16.mxu0 %v444
        %700 = vmatpush1.bf16.msra.mxu0 %v443
        %701 = vmatprep.subr.bf16.mxu0 %v441
        %702 = vmatpush1.bf16.msra.mxu0 %v440
        %703 = vmatprep.subr.bf16.mxu0 %v415
        %704 = vmatpush1.bf16.msra.mxu0 %v414
        %705 = vmatprep.subr.bf16.mxu0 %v412
        %706 = vmatpush1.bf16.msra.mxu0 %v411
        %707 = vmatprep.subr.bf16.mxu0 %v380
        %708 = vmatpush1.bf16.msra.mxu0 %v379
        %709 = vmatprep.subr.bf16.mxu0 %v377
        %710 = vmatpush1.bf16.msra.mxu0 %v376
        %711 = vmatprep.subr.bf16.mxu0 %v589
        %712 = vmatpush2.bf16.msra.mxu0 %v588
        %713 = vmatprep.subr.bf16.mxu0 %v586
        %714 = vmatpush2.bf16.msra.mxu0 %v585
        %715 = vmatprep.subr.bf16.mxu0 %v560
        %716 = vmatpush2.bf16.msra.mxu0 %v559
        %717 = vmatprep.subr.bf16.mxu0 %v557
        %718 = vmatpush2.bf16.msra.mxu0 %v556
        %719 = vmatprep.subr.bf16.mxu0 %v531
        %720 = vmatpush2.bf16.msra.mxu0 %v530
        %721 = vmatprep.subr.bf16.mxu0 %v528
        %722 = vmatpush2.bf16.msra.mxu0 %v527
        %723 = vmatprep.subr.bf16.mxu0 %v502
        %724 = vmatpush2.bf16.msra.mxu0 %v501
        %725 = vmatprep.subr.bf16.mxu0 %v499
        %726 = vmatpush2.bf16.msra.mxu0 %v498
        %727 = vmatprep.mubr.bf16.mxu0 %v679
        %728 = vmatmul.mubr.bf16.gmra.mxu0 %v678
        %v729 = vpop.f32.mrf.mxu0
        %v730 = vadd.f32 %v641, %v729
        %v731 = vpop.f32.mrf.mxu0
        %v732 = vadd.f32 %v641, %v731
        %v733 = vpop.f32.mrf.mxu0
        %v734 = vadd.f32 %v646, %v733
        %v735 = vpop.f32.mrf.mxu0
        %v736 = vadd.f32 %v646, %v735
        %737 = vmatprep.mubr.bf16.mxu0 %v682
        %738 = vmatmul.mubr.bf16.gmra.mxu0 %v681
        %v739 = vpop.f32.mrf.mxu0
        %v740 = vadd.f32 %v651, %v739
        %v741 = vpop.f32.mrf.mxu0
        %v742 = vadd.f32 %v651, %v741
        %v743 = vpop.f32.mrf.mxu0
        %v744 = vadd.f32 %v656, %v743
        %v745 = vpop.f32.mrf.mxu0
        %v746 = vadd.f32 %v656, %v745
        %747 = vdwg.mxu0
        %748 = vmatprep.subr.bf16.mxu0 0
        %749 = vmatpush1.bf16.msra.mxu0 0
        %750 = vmatprep.subr.bf16.mxu0 0
        %751 = vmatpush1.bf16.msra.mxu0 0
        %752 = vmatprep.subr.bf16.mxu0 0
        %753 = vmatpush1.bf16.msra.mxu0 0
        %754 = vmatprep.subr.bf16.mxu0 0
        %755 = vmatpush1.bf16.msra.mxu0 0
        %756 = vmatprep.subr.bf16.mxu0 0
        %757 = vmatpush1.bf16.msra.mxu0 0
        %758 = vmatprep.subr.bf16.mxu0 0
        %759 = vmatpush1.bf16.msra.mxu0 0
        %760 = vmatprep.subr.bf16.mxu0 %v618
        %761 = vmatpush1.bf16.msra.mxu0 %v617
        %762 = vmatprep.subr.bf16.mxu0 %v615
        %763 = vmatpush1.bf16.msra.mxu0 %v614
        %764 = vmatprep.subr.bf16.mxu0 0
        %765 = vmatpush2.bf16.msra.mxu0 0
        %766 = vmatprep.subr.bf16.mxu0 0
        %767 = vmatpush2.bf16.msra.mxu0 0
        %768 = vmatprep.subr.bf16.mxu0 0
        %769 = vmatpush2.bf16.msra.mxu0 0
        %770 = vmatprep.subr.bf16.mxu0 0
        %771 = vmatpush2.bf16.msra.mxu0 0
        %772 = vmatprep.subr.bf16.mxu0 0
        %773 = vmatpush2.bf16.msra.mxu0 0
        %774 = vmatprep.subr.bf16.mxu0 0
        %775 = vmatpush2.bf16.msra.mxu0 0
        %776 = vmatprep.subr.bf16.mxu0 0
        %777 = vmatpush2.bf16.msra.mxu0 0
        %778 = vmatprep.subr.bf16.mxu0 0
        %779 = vmatpush2.bf16.msra.mxu0 0
        %780 = vmatprep.mubr.bf16.mxu0 0
        %781 = vmatmul.mubr.bf16.gmra.mxu0 %v690
        %v782 = vpop.f32.mrf.mxu0
        %v783 = vadd.f32 %v730, %v782
        %v784 = vpop.f32.mrf.mxu0
        %v785 = vadd.f32 %v732, %v784
        %v786 = vpop.f32.mrf.mxu0
        %v787 = vadd.f32 %v734, %v786
        %v788 = vpop.f32.mrf.mxu0
        %v789 = vadd.f32 %v736, %v788
        %790 = vmatprep.mubr.bf16.mxu0 0
        %791 = vmatmul.mubr.bf16.gmra.mxu0 %v693
        %v792 = vpop.f32.mrf.mxu0
        %v793 = vadd.f32 %v740, %v792
        %v794 = vpop.f32.mrf.mxu0
        %v795 = vadd.f32 %v742, %v794
        %v796 = vpop.f32.mrf.mxu0
        %v797 = vadd.f32 %v744, %v796
        %v798 = vpop.f32.mrf.mxu0
        %v799 = vadd.f32 %v746, %v798
        %800 = vdwg.mxu0
        %801 = vmatprep.subr.bf16.mxu0 0
        %802 = vmatpush1.bf16.msra.mxu0 %v474
        %803 = vmatprep.subr.bf16.mxu0 0
        %804 = vmatpush1.bf16.msra.mxu0 %v471
        %805 = vmatprep.subr.bf16.mxu0 0
        %806 = vmatpush1.bf16.msra.mxu0 %v445
        %807 = vmatprep.subr.bf16.mxu0 0
        %808 = vmatpush1.bf16.msra.mxu0 %v442
        %809 = vmatprep.subr.bf16.mxu0 0
        %810 = vmatpush1.bf16.msra.mxu0 %v416
        %811 = vmatprep.subr.bf16.mxu0 0
        %812 = vmatpush1.bf16.msra.mxu0 %v413
        %813 = vmatprep.subr.bf16.mxu0 0
        %814 = vmatpush1.bf16.msra.mxu0 %v381
        %815 = vmatprep.subr.bf16.mxu0 0
        %816 = vmatpush1.bf16.msra.mxu0 %v378
        %817 = vmatprep.subr.bf16.mxu0 0
        %818 = vmatpush2.bf16.msra.mxu0 %v590
        %819 = vmatprep.subr.bf16.mxu0 0
        %820 = vmatpush2.bf16.msra.mxu0 %v587
        %821 = vmatprep.subr.bf16.mxu0 0
        %822 = vmatpush2.bf16.msra.mxu0 %v561
        %823 = vmatprep.subr.bf16.mxu0 0
        %824 = vmatpush2.bf16.msra.mxu0 %v558
        %825 = vmatprep.subr.bf16.mxu0 0
        %826 = vmatpush2.bf16.msra.mxu0 %v532
        %827 = vmatprep.subr.bf16.mxu0 0
        %828 = vmatpush2.bf16.msra.mxu0 %v529
        %829 = vmatprep.subr.bf16.mxu0 0
        %830 = vmatpush2.bf16.msra.mxu0 %v503
        %831 = vmatprep.subr.bf16.mxu0 0
        %832 = vmatpush2.bf16.msra.mxu0 %v500
        %833 = vmatprep.mubr.bf16.mxu0 %v679
        %834 = vmatmul.mubr.bf16.gmra.mxu0 %v678
        %v835 = vpop.f32.mrf.mxu0
        %v836 = vadd.f32 %v641, %v835
        %v837 = vpop.f32.mrf.mxu0
        %v838 = vpop.f32.mrf.mxu0
        %v839 = vadd.f32 %v646, %v838
        %v840 = vpop.f32.mrf.mxu0
        %841 = vmatprep.mubr.bf16.mxu0 %v682
        %842 = vmatmul.mubr.bf16.gmra.mxu0 %v681
        %v843 = vpop.f32.mrf.mxu0
        %v844 = vadd.f32 %v651, %v843
        %v845 = vpop.f32.mrf.mxu0
        %v846 = vpop.f32.mrf.mxu0
        %v847 = vadd.f32 %v656, %v846
        %v848 = vpop.f32.mrf.mxu0
        %849 = vdwg.mxu0
        %850 = vmatprep.subr.bf16.mxu0 0
        %851 = vmatpush1.bf16.msra.mxu0 0
        %852 = vmatprep.subr.bf16.mxu0 0
        %853 = vmatpush1.bf16.msra.mxu0 0
        %854 = vmatprep.subr.bf16.mxu0 0
        %855 = vmatpush1.bf16.msra.mxu0 0
        %856 = vmatprep.subr.bf16.mxu0 0
        %857 = vmatpush1.bf16.msra.mxu0 0
        %858 = vmatprep.subr.bf16.mxu0 0
        %859 = vmatpush1.bf16.msra.mxu0 0
        %860 = vmatprep.subr.bf16.mxu0 0
        %861 = vmatpush1.bf16.msra.mxu0 0
        %862 = vmatprep.subr.bf16.mxu0 0
        %863 = vmatpush1.bf16.msra.mxu0 %v619
        %864 = vmatprep.subr.bf16.mxu0 0
        %865 = vmatpush1.bf16.msra.mxu0 %v616
        %866 = vmatprep.subr.bf16.mxu0 0
        %867 = vmatpush2.bf16.msra.mxu0 0
        %868 = vmatprep.subr.bf16.mxu0 0
        %869 = vmatpush2.bf16.msra.mxu0 0
        %870 = vmatprep.subr.bf16.mxu0 0
        %871 = vmatpush2.bf16.msra.mxu0 0
        %872 = vmatprep.subr.bf16.mxu0 0
        %873 = vmatpush2.bf16.msra.mxu0 0
        %874 = vmatprep.subr.bf16.mxu0 0
        %875 = vmatpush2.bf16.msra.mxu0 0
        %876 = vmatprep.subr.bf16.mxu0 0
        %877 = vmatpush2.bf16.msra.mxu0 0
        %878 = vmatprep.subr.bf16.mxu0 0
        %879 = vmatpush2.bf16.msra.mxu0 0
        %880 = vmatprep.subr.bf16.mxu0 0
        %881 = vmatpush2.bf16.msra.mxu0 0
        %882 = vmatprep.mubr.bf16.mxu0 0
        %883 = vmatmul.mubr.bf16.gmra.mxu0 %v690
        %v884 = vpop.f32.mrf.mxu0
        %v885 = vadd.f32 %v836, %v884
        %v886 = vpop.f32.mrf.mxu0
        %v887 = vpop.f32.mrf.mxu0
        %v888 = vadd.f32 %v839, %v887
        %v889 = vpop.f32.mrf.mxu0
        %890 = vmatprep.mubr.bf16.mxu0 0
        %891 = vmatmul.mubr.bf16.gmra.mxu0 %v693
        %v892 = vpop.f32.mrf.mxu0
        %v893 = vadd.f32 %v844, %v892
        %v894 = vpop.f32.mrf.mxu0
        %v895 = vpop.f32.mrf.mxu0
        %v896 = vadd.f32 %v847, %v895
        %v897 = vpop.f32.mrf.mxu0
        %898 = vdwg.mxu0
        %s899 = sld [smem:[#allocation2]]
        %vm900 = vcmp.ge.f32.partialorder %v783, 0.0
        %vm901 = vcmp.ge.f32.partialorder %v785, 0.0
        %vm902 = vcmp.ge.f32.partialorder %v885, 0.0
        %vm903 = vcmp.ge.f32.partialorder %v787, 0.0
        %vm904 = vcmp.ge.f32.partialorder %v789, 0.0
        %vm905 = vcmp.ge.f32.partialorder %v888, 0.0
        %vm906 = vcmp.ge.f32.partialorder %v793, 0.0
        %vm907 = vcmp.ge.f32.partialorder %v795, 0.0
        %vm908 = vcmp.ge.f32.partialorder %v893, 0.0
        %vm909 = vcmp.ge.f32.partialorder %v797, 0.0
        %vm910 = vcmp.ge.f32.partialorder %v799, 0.0
        %vm911 = vcmp.ge.f32.partialorder %v896, 0.0
        %v912 = vstv %s899
        %v913 = vmul.f32 %v912, %v783
        %v914 = vmul.f32 %v912, %v785
        %v915 = vmul.f32 %v912, %v885
        %v916 = vmul.f32 %v912, %v787
        %v917 = vmul.f32 %v912, %v789
        %v918 = vmul.f32 %v912, %v888
        %v919 = vmul.f32 %v912, %v793
        %v920 = vmul.f32 %v912, %v795
        %v921 = vmul.f32 %v912, %v893
        %v922 = vmul.f32 %v912, %v797
        %v923 = vmul.f32 %v912, %v799
        %v924 = vmul.f32 %v912, %v896
        %v925 = vsel %vm900, %v783, %v913
        %v926 = vsel %vm901, %v785, %v914
        %v927 = vsel %vm902, %v885, %v915
        %v928 = vsel %vm903, %v787, %v916
        %v929 = vsel %vm904, %v789, %v917
        %v930 = vsel %vm905, %v888, %v918
        %v931 = vsel %vm906, %v793, %v919
        %v932 = vsel %vm907, %v795, %v920
        %v933 = vsel %vm908, %v893, %v921
        %v934 = vsel %vm909, %v797, %v922
        %v935 = vsel %vm910, %v799, %v923
        %v936 = vsel %vm911, %v896, %v924
        %v937 = vld [vmem:[%s7] sm:$0x7]
        %v939 = vlaneseq
        %v940 = vshrl.u32 %v939, 7
        %v941 = vsub.s32 0, %v940
        %v942 = vrot.slane %v937, %v941
        %v943 = vlaneseq
        %v944 = vshrl.u32 %v943, 7
        %v945 = vsub.s32 1, %v944
        %v946 = vrot.slane %v937, %v945
        %v947 = vlaneseq
        %v948 = vshrl.u32 %v947, 7
        %v949 = vsub.s32 2, %v948
        %v950 = vrot.slane %v937, %v949
        %v954 = vmul.f32 %v925, %v942
        %v955 = vmul.f32 %v926, %v946
        %v956 = vmul.f32 %v927, %v950
        %v957 = vmul.f32 %v928, %v942
        %v958 = vmul.f32 %v929, %v946
        %v959 = vmul.f32 %v930, %v950
        %v960 = vmul.f32 %v931, %v942
        %v961 = vmul.f32 %v932, %v946
        %v962 = vmul.f32 %v933, %v950
        %v963 = vmul.f32 %v934, %v942
        %v964 = vmul.f32 %v935, %v946
        %v965 = vmul.f32 %v936, %v950
        %v966 = vadd.f32 %v954, %v955
        %v967 = vadd.f32 %v966, %v956
        %968 = vadd.xlane.f32.xlu0 %v967
        %v969 = vpop.xlane.xlu0 %968
        %v970 = vadd.f32 %v957, %v958
        %v971 = vadd.f32 %v970, %v959
        %972 = vadd.xlane.f32.xlu0 %v971
        %v973 = vpop.xlane.xlu0 %972
        %v974 = vadd.f32 %v960, %v961
        %v975 = vadd.f32 %v974, %v962
        %976 = vadd.xlane.f32.xlu0 %v975
        %v977 = vpop.xlane.xlu0 %976
        %v978 = vadd.f32 %v963, %v964
        %v979 = vadd.f32 %v978, %v965
        %980 = vadd.xlane.f32.xlu0 %v979
        %v981 = vpop.xlane.xlu0 %980
        %v982 = vmul.f32 %v969, 0.00390625
        %v983 = vmul.f32 %v973, 0.00390625
        %v984 = vmul.f32 %v977, 0.00390625
        %v985 = vmul.f32 %v981, 0.00390625
        %v986 = vld [vmem:[%s3] sm:$0xff]
        %v987 = vld [vmem:[%s3 + $0x8] sm:$0xff]
        %v988 = vld [vmem:[%s3 + $0x10] sm:$0xff]
        %v989 = vld [vmem:[%s3 + $0x18] sm:$0xff]
        %v990 = vmul.f32 %v986, %v982
        %v991 = vmul.f32 %v987, %v983
        %v992 = vmul.f32 %v988, %v984
        %v993 = vmul.f32 %v989, %v985
        %vm994 = vcmask 15360
        %v995 = vsel %vm994, %v990, 0.0
        %v996 = vsel %vm994, %v991, 0.0
        %v997 = vadd.f32 %v995, %v996
        %v998 = vsel %vm994, %v992, 0.0
        %v999 = vadd.f32 %v997, %v998
        %v1000 = vsel %vm994, %v993, 0.0
        %v1001 = vadd.f32 %v999, %v1000
        %v1002 = vrot.slane %v1001, 4
        %v1003 = vadd.f32 %v1001, %v1002
        %v1004 = vrot.slane %v1003, 2
        %v1005 = vadd.f32 %v1003, %v1004
        %v1006 = vrot.slane %v1005, 1
        %v1007 = vadd.f32 %v1005, %v1006
        %v1008 = vld [vmem:[%s4] sm:$0x1]
        %v1009 = vadd.f32 %v1007, %v1008
        %s1010 = sld [smem:[#allocation2 + $0x1]]
        %vm1011 = vcmp.ge.f32.partialorder %v1009, 0.0
        %v1012 = vstv %s1010
        %v1013 = vmul.f32 %v1012, %v1009
        %v1014 = vsel %vm1011, %v1009, %v1013
        %v1015 = vld [vmem:[%s5] sm:$0xff]
        %v1016 = vld [vmem:[%s5 + $0x8] sm:$0xff]
        %v1017 = vld [vmem:[%s5 + $0x10] sm:$0xff]
        %v1018 = vld [vmem:[%s5 + $0x18] sm:$0xff]
        %v1019 = vlaneseq
        %v1020 = vshrl.u32 %v1019, 7
        %v1021 = vsub.s32 0, %v1020
        %v1022 = vrot.slane %v1014, %v1021
        %v1023 = vmul.f32 %v1015, %v1022
        %v1024 = vmul.f32 %v1016, %v1022
        %v1025 = vmul.f32 %v1017, %v1022
        %v1026 = vmul.f32 %v1018, %v1022
        %v1027 = vsel %vm994, %v1023, 0.0
        %1028 = vadd.xlane.f32.xlu0 %v1027
        %v1029 = vpop.xlane.xlu0 %1028
        %v1030 = vsel %vm994, %v1024, 0.0
        %1031 = vadd.xlane.f32.xlu0 %v1030
        %v1032 = vpop.xlane.xlu0 %1031
        %v1033 = vsel %vm994, %v1025, 0.0
        %1034 = vadd.xlane.f32.xlu0 %v1033
        %v1035 = vpop.xlane.xlu0 %1034
        %v1036 = vsel %vm994, %v1026, 0.0
        %1037 = vadd.xlane.f32.xlu0 %v1036
        %v1038 = vpop.xlane.xlu0 %1037
        %v1039 = vld [vmem:[%s6] sm:$0xff]
        %v1040 = vld [vmem:[%s6 + $0x8] sm:$0xff]
        %v1041 = vld [vmem:[%s6 + $0x10] sm:$0xff]
        %v1042 = vld [vmem:[%s6 + $0x18] sm:$0xff]
        %v1043 = vadd.f32 %v1029, %v1039
        %v1044 = vadd.f32 %v1032, %v1040
        %v1045 = vadd.f32 %v1035, %v1041
        %v1046 = vadd.f32 %v1038, %v1042
        %v1047 = vxor.u32 %v1043, 2147483648
        %v1048 = vxor.u32 %v1044, 2147483648
        %v1049 = vxor.u32 %v1045, 2147483648
        %v1050 = vxor.u32 %v1046, 2147483648
        %v1051 = vmul.f32 %v1047, 1.442695
        %v1052 = vpow.pop %v1051
        %v1053 = vmul.f32 %v1048, 1.442695
        %v1054 = vpow.pop %v1053
        %v1055 = vmul.f32 %v1049, 1.442695
        %v1056 = vpow.pop %v1055
        %v1057 = vmul.f32 %v1050, 1.442695
        %v1058 = vpow.pop %v1057
        %v1059 = vadd.f32 %v1052, 1.0
        %v1060 = vadd.f32 %v1054, 1.0
        %v1061 = vadd.f32 %v1056, 1.0
        %v1062 = vadd.f32 %v1058, 1.0
        %v1063 = vrcp.pop %v1059
        %v1064 = vmul.f32 1.0, %v1063
        %v1065 = vrcp.pop %v1060
        %v1066 = vmul.f32 1.0, %v1065
        %v1067 = vrcp.pop %v1061
        %v1068 = vmul.f32 1.0, %v1067
        %v1069 = vrcp.pop %v1062
        %v1070 = vmul.f32 1.0, %v1069
        %v1071 = vadd.f32 %v1064, 1.0
        %v1072 = vadd.f32 %v1066, 1.0
        %v1073 = vadd.f32 %v1068, 1.0
        %v1074 = vadd.f32 %v1070, 1.0
        %1076 = vset.pattern.permute.xlu0 0
        %1077 = vperm.xlu0 %1076, %v1071
        %v1078 = vpop.permute.xlu0 %1077
        %1081 = vset.pattern.permute.xlu0 0
        %1082 = vperm.xlu0 %1081, %v1072
        %v1083 = vpop.permute.xlu0 %1082
        %1086 = vset.pattern.permute.xlu0 0
        %1087 = vperm.xlu0 %1086, %v1073
        %v1088 = vpop.permute.xlu0 %1087
        %1091 = vset.pattern.permute.xlu0 0
        %1092 = vperm.xlu0 %1091, %v1074
        %v1093 = vpop.permute.xlu0 %1092
        %v1095 = vmul.f32 %v925, %v1078
        %v1096 = vmul.f32 %v926, %v1078
        %v1097 = vmul.f32 %v927, %v1078
        %v1098 = vmul.f32 %v928, %v1083
        %v1099 = vmul.f32 %v929, %v1083
        %v1100 = vmul.f32 %v930, %v1083
        %v1101 = vmul.f32 %v931, %v1088
        %v1102 = vmul.f32 %v932, %v1088
        %v1103 = vmul.f32 %v933, %v1088
        %v1104 = vmul.f32 %v934, %v1093
        %v1105 = vmul.f32 %v935, %v1093
        %v1106 = vmul.f32 %v936, %v1093
        %1107 = vst [vmem:[%s346] sm:$0xff] %v1095
        %1108 = vst [vmem:[%s346 + $0x8] sm:$0xff] %v1096
        %1109 = vst [vmem:[%s346 + $0x10] sm:$0xff] %v1097
        %1110 = vst [vmem:[%s346 + $0x18] sm:$0xff] %v1098
        %1111 = vst [vmem:[%s346 + $0x20] sm:$0xff] %v1099
        %1112 = vst [vmem:[%s346 + $0x28] sm:$0xff] %v1100
        %1113 = vst [vmem:[%s346 + $0x30] sm:$0xff] %v1101
        %1114 = vst [vmem:[%s346 + $0x38] sm:$0xff] %v1102
        %1115 = vst [vmem:[%s346 + $0x40] sm:$0xff] %v1103
        %1116 = vst [vmem:[%s346 + $0x48] sm:$0xff] %v1104
        %1117 = vst [vmem:[%s346 + $0x50] sm:$0xff] %v1105
        %1118 = vst [vmem:[%s346 + $0x58] sm:$0xff] %v1106
        %p1119 = scmp.lt.s32.totalorder %s21, 1
        %s1120 = scalar_select %p1119, %s21, 1
        %s1121 = smul.addr %s1120, 12
        %s1122 = smul.addr %s1121, 8
        %s1123 = scalar_lea.vmem %s9, %s1122
        // Predicated region
        $region61: #{conv_prelu_cam.1} parent=55 // pred_check
          %p1124 = pneg %p233
        $region62: #{conv_prelu_cam.1} parent=55 // pred_check_branch
          %1126 = sbr.rel (%p1124) target = $region64
        $region63: #{conv_prelu_cam.1} parent=55 // pred_region
          _
        $region64: #{conv_prelu_cam.1} parent=55 // pred_fallthru
          _
      $region56: #{conv_prelu_cam.1} parent=5 // pred_fallthru
        _
      %p1127 = scmp.le.s32.totalorder 2, %s16
      // Predicated region
      $region65: #{conv_prelu_cam.1} parent=5 // pred_check
        %p1128 = pneg %p1127
      $region66: #{conv_prelu_cam.1} parent=5 // pred_check_branch
        %1130 = sbr.rel (%p1128) target = $region68
      $region67: #{conv_prelu_cam.1} parent=5 // pred_region
        %s1131 = ssub.s32 %s16, 2
        // Predicated region
        $region69: #{conv_prelu_cam.1} parent=67 // pred_check
          %p1132 = pneg %p239
        $region70: #{conv_prelu_cam.1} parent=67 // pred_check_branch
          %1134 = sbr.rel (%p1132) target = $region72
        $region71: #{conv_prelu_cam.1} parent=67 // pred_region
          %p1135 = scmp.lt.s32.totalorder %s22, 1
          %s1136 = scalar_select %p1135, %s22, 1
          %s1137 = smul.addr %s1136, 12
          %s1138 = smul.addr %s1137, 8
          %s1139 = scalar_lea.vmem %s9, %s1138
        $region72: #{conv_prelu_cam.1} parent=67 // pred_fallthru
          _
      $region68: #{conv_prelu_cam.1} parent=5 // pred_fallthru
        _
    $region6: #{conv_prelu_cam.1} parent=1 // loop_footer
      %s20 = sadd.s32 1, %s16
    $region7: #{conv_prelu_cam.1} parent=1 // loop_footer_branch
      %15 = sbr.rel target = $region3
    $region8: #{conv_prelu_cam.1} parent=1 // loop_exit
      _
    %1140 = vsyncpa [#allocation3], 1
    %s1141 = scalar_lea.sflag [#allocation3], 1
    %1142 = vsyncpa %s1141, 1

</llo_original>
